<compile_context>
chip_gen: v5e
topology: v5e:2x2
jax: 0.10.0
libtpu: 0.0.40
codegen_flags: <defaults>
</compile_context>

<pallas_src>
import functools

import jax
import jax.numpy as jnp
from jax import lax
from jax.experimental import pallas as pl
from jax.experimental.pallas import tpu as pltpu

_VMEM_LIMIT = 48 * 1024 * 1024   # <= v7x's 64 MiB per-TC VMEM; ample on v5e/v6e
_TARGET_M = 4096                 # target flat rows per matmul tile


def _round_up(x, m):
    return ((x + m - 1) // m) * m


def _cdiv(a, b):
    return -(-a // b)


# --------------------------- Pallas fused conv kernel ------------------------

def _conv_tap_kernel(x0_ref, x1_ref, w_ref, b_ref, o_ref, *, taps, relu):
    """One output row-block of a stride-1 conv.

    x0_ref: (1, mtile, C)     current flattened row block (bf16)
    x1_ref: (1, 1, hsize, C)  halo strip (next kh-ish rows) for this block (bf16)
    w_ref:  (D, C, Cout)      per-tap weights, fully resident (bf16)
    b_ref:  (1, Cout)         bias (f32)
    o_ref:  (1, mtile, Cout)
    taps:   static tuple of flat-row offsets d = ki * W8 + kj
    """
    x0 = x0_ref[0]                      # (mtile, C)
    x1 = x1_ref[0, 0]                   # (hsize, C)
    acc = None
    for t, d in enumerate(taps):        # static unrolled tap loop
        if d == 0:
            a = x0
        else:
            # flat rows [d, d + mtile) of (block ++ halo), shifted into place
            a = jnp.concatenate([x0[d:], x1[:d]], axis=0)
        p = jnp.dot(a, w_ref[t], preferred_element_type=jnp.float32)
        acc = p if acc is None else acc + p
    acc = acc + b_ref[...]              # (1, Cout) broadcast, f32
    if relu:
        acc = jnp.maximum(acc, 0.0)
    o_ref[0] = acc.astype(o_ref.dtype)


def conv_fused(x, w, b, kh, kw, relu, target_m=_TARGET_M):
    """Valid stride-1 convolution via the fused tap kernel.

    x: (N, H, W, C)  NHWC activation, already spatially padded for the conv.
    w: (kh*kw, C, Cout)  weights with taps ordered (ki, kj) row-major.
    b: (Cout,) or None.
    Returns (N, H-kh+1, W-kw+1, Cout) in bf16.
    """
    x = x.astype(jnp.bfloat16)
    w = w.astype(jnp.bfloat16)
    N, H, W, C = x.shape
    D, Cw, Cout = w.shape
    assert D == kh * kw and Cw == C
    OH, OW = H - kh + 1, W - kw + 1

    # Flat layout: pad W to a multiple of 8 (sublane), pick R output rows per
    # block; the halo is a separate small strip of HR rows per block.
    W8 = _round_up(W, 8)
    HR = max(1, kh if kw > 1 else kh - 1)      # halo rows needed per block
    R = max(1, min(OH, target_m // W8))
    NB = _cdiv(OH, R)
    R = _cdiv(OH, NB)
    R = max(R, HR)                             # halo slicing below needs R >= HR
    NB = _cdiv(OH, R)
    HPAD = (NB + 1) * R                        # >= H and >= NB*R + HR
    mtile = R * W8
    hsize = HR * W8

    xp = jnp.pad(x, ((0, 0), (0, HPAD - H), (0, W8 - W), (0, 0)))
    xflat = xp.reshape(N, HPAD * W8, C)        # free bitcast view
    # halo[n, i] = rows [(i+1)*R, (i+1)*R + HR) of xp  -> (N, NB, HR*W8, C)
    xhalo = (xp[:, R:(NB + 1) * R]
             .reshape(N, NB, R, W8, C)[:, :, :HR]
             .reshape(N, NB, hsize, C))

    if b is None:
        b = jnp.zeros((Cout,), jnp.float32)
    b2 = b.reshape(1, Cout).astype(jnp.float32)

    taps = tuple(ki * W8 + kj for ki in range(kh) for kj in range(kw))

    flops = 2 * N * NB * mtile * D * C * Cout
    bytes_accessed = (N * HPAD * W8 * C * 2        # activation blocks, bf16
                      + N * NB * hsize * C * 2     # halo strips, bf16
                      + D * C * Cout * 2           # weights, bf16
                      + N * NB * mtile * Cout * 2) # output, bf16

    out = pl.pallas_call(
        functools.partial(_conv_tap_kernel, taps=taps, relu=relu),
        out_shape=jax.ShapeDtypeStruct((N, NB * mtile, Cout), jnp.bfloat16),
        grid=(N, NB),
        in_specs=[
            pl.BlockSpec((1, mtile, C), lambda n, i: (n, i, 0)),        # block i
            pl.BlockSpec((1, 1, hsize, C), lambda n, i: (n, i, 0, 0)),  # halo strip
            pl.BlockSpec((D, C, Cout), lambda n, i: (0, 0, 0)),         # resident W
            pl.BlockSpec((1, Cout), lambda n, i: (0, 0)),               # bias
        ],
        out_specs=pl.BlockSpec((1, mtile, Cout), lambda n, i: (n, i, 0)),
        compiler_params=pltpu.CompilerParams(
            dimension_semantics=("parallel", "parallel"),
            vmem_limit_bytes=_VMEM_LIMIT),
        cost_estimate=pl.CostEstimate(flops=flops, transcendentals=0,
                                      bytes_accessed=bytes_accessed),
    )(xflat, xhalo, w, b2)

    out = out.reshape(N, NB * R, W8, Cout)[:, :OH, :OW, :]
    return out


# --------------------------- glue helpers ------------------------------------

def _fold_w_taps(x, kw):
    """Fold kw horizontal conv taps into channels:
       out[n, h, ow, j*C + c] = x[n, h, ow + j, c].  (N,H,W,C)->(N,H,W-kw+1,kw*C)."""
    ow = x.shape[2] - kw + 1
    return jnp.concatenate([x[:, :, j:j + ow, :] for j in range(kw)], axis=-1)


def conv3x3(x, w_hwio, b, pad, relu):
    """3x3 stride-1 conv with full tap fusion (used for large-Cin layers)."""
    xp = jnp.pad(x, ((0, 0), (pad, pad), (pad, pad), (0, 0)))
    kh, kw, cin, cout = w_hwio.shape
    wq = w_hwio.reshape(kh * kw, cin, cout)
    return conv_fused(xp, wq, b, kh=kh, kw=kw, relu=relu)


# Pooling is deliberately left to XLA (lax.reduce_window): purely mem-bound,
# and this avoids materializing pooling windows in HBM.
def max_pool(x, k, s):
    return lax.reduce_window(x, jnp.array(-jnp.inf, x.dtype), lax.max,
                             (1, k, k, 1), (1, s, s, 1), "VALID")


def avg_pool_f32(x, k, s):
    acc = lax.reduce_window(x.astype(jnp.float32), jnp.float32(0.0), lax.add,
                            (1, k, k, 1), (1, s, s, 1), "VALID")
    return acc * (1.0 / (k * k))


# --------------------------- parameters & forward ----------------------------

def init_params(key):
    # TODO(synk): pretrained torchvision AlexNet weights are not available
    # in-script; deterministic He-normal init is used instead.
    def conv_w(k, kh, kw, cin, cout):
        fan_in = kh * kw * cin
        return (jax.random.normal(k, (kh, kw, cin, cout), jnp.float32)
                * jnp.sqrt(2.0 / fan_in))

    ks = jax.random.split(key, 8)
    p = {}
    p["c1_w"] = conv_w(ks[0], 11, 11, 3, 64);   p["c1_b"] = jnp.zeros((64,), jnp.float32)
    p["c2_w"] = conv_w(ks[1], 5, 5, 64, 192);   p["c2_b"] = jnp.zeros((192,), jnp.float32)
    p["c3_w"] = conv_w(ks[2], 3, 3, 192, 384);  p["c3_b"] = jnp.zeros((384,), jnp.float32)
    p["c4_w"] = conv_w(ks[3], 3, 3, 384, 256);  p["c4_b"] = jnp.zeros((256,), jnp.float32)
    p["c5_w"] = conv_w(ks[4], 3, 3, 256, 256);  p["c5_b"] = jnp.zeros((256,), jnp.float32)
    p["t_w"]  = conv_w(ks[5], 3, 3, 256, 256)   # transition conv, bias=False
    p["fc_w"] = (jax.random.normal(ks[6], (256, 14), jnp.float32)
                 * (1.0 / jnp.sqrt(256.0)))     # stored as (in, out)
    p["fc_b"] = jnp.zeros((14,), jnp.float32)
    return p


def forward(params, x_nchw):
    x = jnp.transpose(x_nchw.astype(jnp.bfloat16), (0, 2, 3, 1))   # NCHW -> NHWC
    N = x.shape[0]

    # ---- conv1: Conv2d(3,64,k=11,s=4,p=2)+ReLU via space-to-depth(4) ---------
    xp = jnp.pad(x, ((0, 0), (2, 2), (2, 2), (0, 0)))              # (N,1028,1028,3)
    H4, W4 = xp.shape[1] // 4, xp.shape[2] // 4                    # 257, 257
    xf = xp.reshape(N, H4, 4, W4, 4, 3).transpose(0, 1, 3, 2, 4, 5)
    xf = xf.reshape(N, H4, W4, 48)                                 # folded (s=1, k=3)
    xq = _fold_w_taps(xf, 3)                                       # (N,257,255,144)
    w1 = jnp.pad(params["c1_w"], ((0, 1), (0, 1), (0, 0), (0, 0))) # (12,12,3,64)
    w1 = w1.reshape(3, 4, 3, 4, 3, 64).transpose(0, 2, 1, 3, 4, 5) # (fi,fj,di,dj,c,co)
    w1 = w1.reshape(3, 144, 64)                                    # taps along H only
    x = conv_fused(xq, w1, params["c1_b"], kh=3, kw=1, relu=True)  # (N,255,255,64)

    x = max_pool(x, 3, 2)                                          # (N,127,127,64)

    # ---- conv2: Conv2d(64,192,k=5,p=2)+ReLU, W-taps folded into channels -----
    xp = jnp.pad(x, ((0, 0), (2, 2), (2, 2), (0, 0)))              # (N,131,131,64)
    xq = _fold_w_taps(xp, 5)                                       # (N,131,127,320)
    w2 = params["c2_w"].reshape(5, 5 * 64, 192)                    # taps along H only
    x = conv_fused(xq, w2, params["c2_b"], kh=5, kw=1, relu=True)  # (N,127,127,192)

    x = max_pool(x, 3, 2)                                          # (N,63,63,192)

    # ---- conv3/4/5: 3x3 pad 1 + ReLU (fully fused 9 taps) --------------------
    x = conv3x3(x, params["c3_w"], params["c3_b"], pad=1, relu=True)   # (N,63,63,384)
    x = conv3x3(x, params["c4_w"], params["c4_b"], pad=1, relu=True)   # (N,63,63,256)
    x = conv3x3(x, params["c5_w"], params["c5_b"], pad=1, relu=True)   # (N,63,63,256)

    # ---- transition: Conv2d(256,256,k=3,p=2,bias=False) + AvgPool2d(2,2) -----
    x = conv3x3(x, params["t_w"], None, pad=2, relu=False)             # (N,65,65,256)
    x = avg_pool_f32(x, 2, 2)                                          # (N,32,32,256)

    # ---- globalPool: MaxPool2d(32) -> flatten -> Linear(256, 14) (plain jnp) -
    x = jnp.max(x, axis=(1, 2))                                        # (N,256) f32
    return x @ params["fc_w"] + params["fc_b"]                         # (N,14)


def _selfcheck_conv_kernel(key):
    """Tiny multi-block check of conv_fused against lax.conv (loose bf16 tol)."""
    k1, k2 = jax.random.split(key)
    xt = jax.random.normal(k1, (1, 17, 19, 8), jnp.float32)
    wt = jax.random.normal(k2, (3, 3, 8, 16), jnp.float32) * 0.25
    bt = jnp.linspace(-1.0, 1.0, 16, dtype=jnp.float32)

    xtp = jnp.pad(xt, ((0, 0), (1, 1), (1, 1), (0, 0)))
    got = conv_fused(xtp, wt.reshape(9, 8, 16), bt, kh=3, kw=3,
                     relu=True, target_m=96).astype(jnp.float32)

    ref = lax.conv_general_dilated(
        xt.astype(jnp.bfloat16).astype(jnp.float32),
        wt.astype(jnp.bfloat16).astype(jnp.float32),
        window_strides=(1, 1), padding=[(1, 1), (1, 1)],
        dimension_numbers=("NHWC", "HWIO", "NHWC")) + bt
    ref = jnp.maximum(ref, 0.0)

    got, ref = jax.block_until_ready((got, ref))
    assert got.shape == ref.shape, (got.shape, ref.shape)
    err = float(jnp.max(jnp.abs(got - ref)))
    assert bool(jnp.allclose(got, ref, atol=0.1, rtol=0.05)), err


if __name__ == "__main__":
    key = jax.random.PRNGKey(0)
    pkey, xkey, ckey = jax.random.split(key, 3)

    _selfcheck_conv_kernel(ckey)

    params = init_params(pkey)
    # Smallest input consistent with MaxPool2d(32) + Linear(256, 14): ~1024 px.
    x = jax.random.normal(xkey, (1, 3, 1024, 1024), jnp.float32)
    fwd = jax.jit(forward)
    out = jax.block_until_ready(fwd(params, x))
    assert out.shape == (1, 14), out.shape
    assert bool(jnp.all(jnp.isfinite(out)))
    print("KERNEL_OK")
</pallas_src>

<mosaic_0001>
module attributes {stable_mosaic.version = 11 : i64} {
  func.func @_conv_tap_kernel(%arg0: i32, %arg1: i32, %arg2: memref<1x96x8xbf16, #tpu.memory_space<vmem>>, %arg3: memref<1x1x72x8xbf16, #tpu.memory_space<vmem>>, %arg4: memref<9x8x16xbf16, #tpu.memory_space<vmem>>, %arg5: memref<1x16xf32, #tpu.memory_space<vmem>>, %arg6: memref<1x96x16xbf16, #tpu.memory_space<vmem>>) attributes {dimension_semantics = [#tpu.dimension_semantics<parallel>, #tpu.dimension_semantics<parallel>], iteration_bounds = array<i64: 1, 5>, scalar_prefetch = 0 : i64, scratch_operands = 0 : i64, tpu.core_type = #tpu.core_type<tc>, window_params = [{transform_indices = @transform_0, window_bounds = array<i64: 1, 96, 8>}, {transform_indices = @transform_1, window_bounds = array<i64: 1, 1, 72, 8>}, {pipeline_mode = #tpu.pipeline_mode<synchronous>, transform_indices = @transform_2, window_bounds = array<i64: 9, 8, 16>}, {pipeline_mode = #tpu.pipeline_mode<synchronous>, transform_indices = @transform_3, window_bounds = array<i64: 1, 16>}, {transform_indices = @transform_4, window_bounds = array<i64: 1, 96, 16>}]} {
    %c0 = arith.constant 0 : index
    %c0_0 = arith.constant 0 : index
    %c0_1 = arith.constant 0 : index
    %0 = vector.load %arg2[%c0, %c0_0, %c0_1] : memref<1x96x8xbf16, #tpu.memory_space<vmem>>, vector<1x96x8xbf16>
    %1 = vector.shape_cast %0 : vector<1x96x8xbf16> to vector<96x8xbf16>
    %c0_2 = arith.constant 0 : index
    %c0_3 = arith.constant 0 : index
    %c0_4 = arith.constant 0 : index
    %c0_5 = arith.constant 0 : index
    %2 = vector.load %arg3[%c0_2, %c0_3, %c0_4, %c0_5] : memref<1x1x72x8xbf16, #tpu.memory_space<vmem>>, vector<1x1x72x8xbf16>
    %3 = vector.shape_cast %2 : vector<1x1x72x8xbf16> to vector<72x8xbf16>
    %c0_6 = arith.constant 0 : index
    %c0_7 = arith.constant 0 : index
    %c0_8 = arith.constant 0 : index
    %4 = vector.load %arg4[%c0_6, %c0_7, %c0_8] : memref<9x8x16xbf16, #tpu.memory_space<vmem>>, vector<1x8x16xbf16>
    %5 = vector.shape_cast %4 : vector<1x8x16xbf16> to vector<8x16xbf16>
    %cst = arith.constant dense<0.000000e+00> : vector<96x16xf32>
    %6 = tpu.matmul %1, %5, %cst {dimension_numbers = #tpu.dot_dimension_numbers<[1], [0], [0], [1], [0, 0, 1, 1], [], []>} : vector<96x8xbf16>, vector<8x16xbf16>, vector<96x16xf32> -> vector<96x16xf32>
    %7 = vector.extract_strided_slice %1 {offsets = [1, 0], sizes = [95, 8], strides = [1, 1]} : vector<96x8xbf16> to vector<95x8xbf16>
    %8 = vector.extract_strided_slice %3 {offsets = [0, 0], sizes = [1, 8], strides = [1, 1]} : vector<72x8xbf16> to vector<1x8xbf16>
    %9 = tpu.concatenate %7, %8 in 0 : vector<95x8xbf16>, vector<1x8xbf16> -> vector<96x8xbf16>
    %c1 = arith.constant 1 : index
    %c0_9 = arith.constant 0 : index
    %c0_10 = arith.constant 0 : index
    %10 = vector.load %arg4[%c1, %c0_9, %c0_10] : memref<9x8x16xbf16, #tpu.memory_space<vmem>>, vector<1x8x16xbf16>
    %11 = vector.shape_cast %10 : vector<1x8x16xbf16> to vector<8x16xbf16>
    %cst_11 = arith.constant dense<0.000000e+00> : vector<96x16xf32>
    %12 = tpu.matmul %9, %11, %cst_11 {dimension_numbers = #tpu.dot_dimension_numbers<[1], [0], [0], [1], [0, 0, 1, 1], [], []>} : vector<96x8xbf16>, vector<8x16xbf16>, vector<96x16xf32> -> vector<96x16xf32>
    %13 = arith.addf %6, %12 : vector<96x16xf32>
    %14 = vector.extract_strided_slice %1 {offsets = [2, 0], sizes = [94, 8], strides = [1, 1]} : vector<96x8xbf16> to vector<94x8xbf16>
    %15 = vector.extract_strided_slice %3 {offsets = [0, 0], sizes = [2, 8], strides = [1, 1]} : vector<72x8xbf16> to vector<2x8xbf16>
    %16 = tpu.concatenate %14, %15 in 0 : vector<94x8xbf16>, vector<2x8xbf16> -> vector<96x8xbf16>
    %c2 = arith.constant 2 : index
    %c0_12 = arith.constant 0 : index
    %c0_13 = arith.constant 0 : index
    %17 = vector.load %arg4[%c2, %c0_12, %c0_13] : memref<9x8x16xbf16, #tpu.memory_space<vmem>>, vector<1x8x16xbf16>
    %18 = vector.shape_cast %17 : vector<1x8x16xbf16> to vector<8x16xbf16>
    %cst_14 = arith.constant dense<0.000000e+00> : vector<96x16xf32>
    %19 = tpu.matmul %16, %18, %cst_14 {dimension_numbers = #tpu.dot_dimension_numbers<[1], [0], [0], [1], [0, 0, 1, 1], [], []>} : vector<96x8xbf16>, vector<8x16xbf16>, vector<96x16xf32> -> vector<96x16xf32>
    %20 = arith.addf %13, %19 : vector<96x16xf32>
    %21 = vector.extract_strided_slice %1 {offsets = [24, 0], sizes = [72, 8], strides = [1, 1]} : vector<96x8xbf16> to vector<72x8xbf16>
    %22 = vector.extract_strided_slice %3 {offsets = [0, 0], sizes = [24, 8], strides = [1, 1]} : vector<72x8xbf16> to vector<24x8xbf16>
    %23 = tpu.concatenate %21, %22 in 0 : vector<72x8xbf16>, vector<24x8xbf16> -> vector<96x8xbf16>
    %c3 = arith.constant 3 : index
    %c0_15 = arith.constant 0 : index
    %c0_16 = arith.constant 0 : index
    %24 = vector.load %arg4[%c3, %c0_15, %c0_16] : memref<9x8x16xbf16, #tpu.memory_space<vmem>>, vector<1x8x16xbf16>
    %25 = vector.shape_cast %24 : vector<1x8x16xbf16> to vector<8x16xbf16>
    %cst_17 = arith.constant dense<0.000000e+00> : vector<96x16xf32>
    %26 = tpu.matmul %23, %25, %cst_17 {dimension_numbers = #tpu.dot_dimension_numbers<[1], [0], [0], [1], [0, 0, 1, 1], [], []>} : vector<96x8xbf16>, vector<8x16xbf16>, vector<96x16xf32> -> vector<96x16xf32>
    %27 = arith.addf %20, %26 : vector<96x16xf32>
    %28 = vector.extract_strided_slice %1 {offsets = [25, 0], sizes = [71, 8], strides = [1, 1]} : vector<96x8xbf16> to vector<71x8xbf16>
    %29 = vector.extract_strided_slice %3 {offsets = [0, 0], sizes = [25, 8], strides = [1, 1]} : vector<72x8xbf16> to vector<25x8xbf16>
    %30 = tpu.concatenate %28, %29 in 0 : vector<71x8xbf16>, vector<25x8xbf16> -> vector<96x8xbf16>
    %c4 = arith.constant 4 : index
    %c0_18 = arith.constant 0 : index
    %c0_19 = arith.constant 0 : index
    %31 = vector.load %arg4[%c4, %c0_18, %c0_19] : memref<9x8x16xbf16, #tpu.memory_space<vmem>>, vector<1x8x16xbf16>
    %32 = vector.shape_cast %31 : vector<1x8x16xbf16> to vector<8x16xbf16>
    %cst_20 = arith.constant dense<0.000000e+00> : vector<96x16xf32>
    %33 = tpu.matmul %30, %32, %cst_20 {dimension_numbers = #tpu.dot_dimension_numbers<[1], [0], [0], [1], [0, 0, 1, 1], [], []>} : vector<96x8xbf16>, vector<8x16xbf16>, vector<96x16xf32> -> vector<96x16xf32>
    %34 = arith.addf %27, %33 : vector<96x16xf32>
    %35 = vector.extract_strided_slice %1 {offsets = [26, 0], sizes = [70, 8], strides = [1, 1]} : vector<96x8xbf16> to vector<70x8xbf16>
    %36 = vector.extract_strided_slice %3 {offsets = [0, 0], sizes = [26, 8], strides = [1, 1]} : vector<72x8xbf16> to vector<26x8xbf16>
    %37 = tpu.concatenate %35, %36 in 0 : vector<70x8xbf16>, vector<26x8xbf16> -> vector<96x8xbf16>
    %c5 = arith.constant 5 : index
    %c0_21 = arith.constant 0 : index
    %c0_22 = arith.constant 0 : index
    %38 = vector.load %arg4[%c5, %c0_21, %c0_22] : memref<9x8x16xbf16, #tpu.memory_space<vmem>>, vector<1x8x16xbf16>
    %39 = vector.shape_cast %38 : vector<1x8x16xbf16> to vector<8x16xbf16>
    %cst_23 = arith.constant dense<0.000000e+00> : vector<96x16xf32>
    %40 = tpu.matmul %37, %39, %cst_23 {dimension_numbers = #tpu.dot_dimension_numbers<[1], [0], [0], [1], [0, 0, 1, 1], [], []>} : vector<96x8xbf16>, vector<8x16xbf16>, vector<96x16xf32> -> vector<96x16xf32>
    %41 = arith.addf %34, %40 : vector<96x16xf32>
    %42 = vector.extract_strided_slice %1 {offsets = [48, 0], sizes = [48, 8], strides = [1, 1]} : vector<96x8xbf16> to vector<48x8xbf16>
    %43 = vector.extract_strided_slice %3 {offsets = [0, 0], sizes = [48, 8], strides = [1, 1]} : vector<72x8xbf16> to vector<48x8xbf16>
    %44 = tpu.concatenate %42, %43 in 0 : vector<48x8xbf16>, vector<48x8xbf16> -> vector<96x8xbf16>
    %c6 = arith.constant 6 : index
    %c0_24 = arith.constant 0 : index
    %c0_25 = arith.constant 0 : index
    %45 = vector.load %arg4[%c6, %c0_24, %c0_25] : memref<9x8x16xbf16, #tpu.memory_space<vmem>>, vector<1x8x16xbf16>
    %46 = vector.shape_cast %45 : vector<1x8x16xbf16> to vector<8x16xbf16>
    %cst_26 = arith.constant dense<0.000000e+00> : vector<96x16xf32>
    %47 = tpu.matmul %44, %46, %cst_26 {dimension_numbers = #tpu.dot_dimension_numbers<[1], [0], [0], [1], [0, 0, 1, 1], [], []>} : vector<96x8xbf16>, vector<8x16xbf16>, vector<96x16xf32> -> vector<96x16xf32>
    %48 = arith.addf %41, %47 : vector<96x16xf32>
    %49 = vector.extract_strided_slice %1 {offsets = [49, 0], sizes = [47, 8], strides = [1, 1]} : vector<96x8xbf16> to vector<47x8xbf16>
    %50 = vector.extract_strided_slice %3 {offsets = [0, 0], sizes = [49, 8], strides = [1, 1]} : vector<72x8xbf16> to vector<49x8xbf16>
    %51 = tpu.concatenate %49, %50 in 0 : vector<47x8xbf16>, vector<49x8xbf16> -> vector<96x8xbf16>
    %c7 = arith.constant 7 : index
    %c0_27 = arith.constant 0 : index
    %c0_28 = arith.constant 0 : index
    %52 = vector.load %arg4[%c7, %c0_27, %c0_28] : memref<9x8x16xbf16, #tpu.memory_space<vmem>>, vector<1x8x16xbf16>
    %53 = vector.shape_cast %52 : vector<1x8x16xbf16> to vector<8x16xbf16>
    %cst_29 = arith.constant dense<0.000000e+00> : vector<96x16xf32>
    %54 = tpu.matmul %51, %53, %cst_29 {dimension_numbers = #tpu.dot_dimension_numbers<[1], [0], [0], [1], [0, 0, 1, 1], [], []>} : vector<96x8xbf16>, vector<8x16xbf16>, vector<96x16xf32> -> vector<96x16xf32>
    %55 = arith.addf %48, %54 : vector<96x16xf32>
    %56 = vector.extract_strided_slice %1 {offsets = [50, 0], sizes = [46, 8], strides = [1, 1]} : vector<96x8xbf16> to vector<46x8xbf16>
    %57 = vector.extract_strided_slice %3 {offsets = [0, 0], sizes = [50, 8], strides = [1, 1]} : vector<72x8xbf16> to vector<50x8xbf16>
    %58 = tpu.concatenate %56, %57 in 0 : vector<46x8xbf16>, vector<50x8xbf16> -> vector<96x8xbf16>
    %c8 = arith.constant 8 : index
    %c0_30 = arith.constant 0 : index
    %c0_31 = arith.constant 0 : index
    %59 = vector.load %arg4[%c8, %c0_30, %c0_31] : memref<9x8x16xbf16, #tpu.memory_space<vmem>>, vector<1x8x16xbf16>
    %60 = vector.shape_cast %59 : vector<1x8x16xbf16> to vector<8x16xbf16>
    %cst_32 = arith.constant dense<0.000000e+00> : vector<96x16xf32>
    %61 = tpu.matmul %58, %60, %cst_32 {dimension_numbers = #tpu.dot_dimension_numbers<[1], [0], [0], [1], [0, 0, 1, 1], [], []>} : vector<96x8xbf16>, vector<8x16xbf16>, vector<96x16xf32> -> vector<96x16xf32>
    %62 = arith.addf %55, %61 : vector<96x16xf32>
    %c0_33 = arith.constant 0 : index
    %c0_34 = arith.constant 0 : index
    %63 = vector.load %arg5[%c0_33, %c0_34] : memref<1x16xf32, #tpu.memory_space<vmem>>, vector<1x16xf32>
    %64 = vector.broadcast %63 : vector<1x16xf32> to vector<96x16xf32>
    %65 = arith.addf %62, %64 : vector<96x16xf32>
    %cst_35 = arith.constant 0.000000e+00 : f32
    %66 = vector.broadcast %cst_35 : f32 to vector<96x16xf32>
    %67 = arith.maximumf %65, %66 : vector<96x16xf32>
    %68 = arith.truncf %67 : vector<96x16xf32> to vector<96x16xbf16>
    %c0_36 = arith.constant 0 : index
    %c0_37 = arith.constant 0 : index
    %c0_38 = arith.constant 0 : index
    %69 = vector.load %arg6[%c0_36, %c0_37, %c0_38] : memref<1x96x16xbf16, #tpu.memory_space<vmem>>, vector<1x96x16xbf16>
    %70 = vector.shape_cast %69 : vector<1x96x16xbf16> to vector<96x16xbf16>
    %71 = vector.shape_cast %68 : vector<96x16xbf16> to vector<1x96x16xbf16>
    tpu.vector_store %arg6[%c0_36, %c0_37, %c0_38], %71 {strides = array<i32>} : memref<1x96x16xbf16, #tpu.memory_space<vmem>>, vector<1x96x16xbf16>,
    return
  }
  func.func @transform_0(%arg0: i32, %arg1: i32) -> (i32, i32, i32) {
    %c0_i32 = arith.constant 0 : i32
    %c0_i32_0 = arith.constant 0 : i32
    return %arg0, %arg1, %c0_i32 : i32, i32, i32
  }
  func.func @transform_1(%arg0: i32, %arg1: i32) -> (i32, i32, i32, i32) {
    %c0_i32 = arith.constant 0 : i32
    %c0_i32_0 = arith.constant 0 : i32
    %c0_i32_1 = arith.constant 0 : i32
    return %arg0, %arg1, %c0_i32, %c0_i32_0 : i32, i32, i32, i32
  }
  func.func @transform_2(%arg0: i32, %arg1: i32) -> (i32, i32, i32) {
    %c0_i32 = arith.constant 0 : i32
    %c0_i32_0 = arith.constant 0 : i32
    %c0_i32_1 = arith.constant 0 : i32
    %c0_i32_2 = arith.constant 0 : i32
    return %c0_i32, %c0_i32_0, %c0_i32_1 : i32, i32, i32
  }
  func.func @transform_3(%arg0: i32, %arg1: i32) -> (i32, i32) {
    %c0_i32 = arith.constant 0 : i32
    %c0_i32_0 = arith.constant 0 : i32
    %c0_i32_1 = arith.constant 0 : i32
    return %c0_i32, %c0_i32_0 : i32, i32
  }
  func.func @transform_4(%arg0: i32, %arg1: i32) -> (i32, i32, i32) {
    %c0_i32 = arith.constant 0 : i32
    %c0_i32_0 = arith.constant 0 : i32
    return %arg0, %arg1, %c0_i32 : i32, i32, i32
  }
}

</mosaic_0001>

<llo_original>
// kernel: tpu_custom_call.1
$region0: #{tpu_custom_call.1}
  #allocation0 [shape = 'u32[]', space=smem, size = 0x4, offset = 0x4, fixed_abs, tag = 'smem constant byte address 0x4 - core index']
  #allocation1 [shape = 'u32[72,128]{1,0:T(1,128)}', space=vmem, size = 0x9000, scoped, tag = 'internal scratch']
  %s0 = inlined_call_operand.vmem [shape: bf16[1,576,8], index: 0, kind: input, shape index: {}]
  %s1 = inlined_call_operand.vmem [shape: bf16[1,5,72,8], index: 1, kind: input, shape index: {}]
  %s2 = inlined_call_operand.vmem [shape: bf16[9,8,16], index: 2, kind: input, shape index: {}]
  %s3 = inlined_call_operand.vmem [shape: f32[1,16], index: 3, kind: input, shape index: {}]
  %s4 = inlined_call_operand.vmem [shape: bf16[1,480,16], index: 4, kind: output, shape index: {}]
  %s5 = sld [smem:[#allocation0]]
  $region49: #{tpu_custom_call.1} parent=0
    _
  %s7 = ssub.s32 1, %s5
  %s8 = scalar_select 0, %s7, %s5
  loop: start=0, step=1, limit=7
  $region2: #{tpu_custom_call.1} parent=0 // loop_pre_header
    _
  $region3: #{tpu_custom_call.1} parent=0 // loop_header
    %s10 = sphi 0, %s14
    %p11 = scmp.ge.s32.totalorder %s10, 7
    %s17 = sphi 0, %s29
    %s18 = sphi 0, %s25
    %s19 = sphi 0, %s17
    %s20 = sphi 0, %s18
    %s21 = sphi 0, %s19
    %s22 = sphi 0, %s20
    %s34 = sphi 0, %s36
    %s37 = sphi 0, %s34
    %s38 = sphi 0, %s37
    %s54 = sphi 0, %s38
    %s62 = sphi 0, %s64
    %s65 = sphi 0, %s62
    %s66 = sphi 0, %s65
    %s82 = sphi 0, %s66
    %s86 = sphi 0, %s86
    %s88 = sphi 0, %s86
    %s89 = sphi 0, %s88
    %s103 = sphi 0, %s89
    %s107 = sphi 0, %s107
    %s109 = sphi 0, %s107
    %s110 = sphi 0, %s109
    %s124 = sphi 0, %s110
    %s132 = sphi 0, %s134
    %s135 = sphi 0, %s132
    %s136 = sphi 0, %s135
    %s152 = sphi 0, %s136
  $region4: #{tpu_custom_call.1} parent=0 // loop_header_branch
    %13 = sbr.rel (%p11) target = $region8
  $region5: #{tpu_custom_call.1} parent=0 // loop_body
    %s15 = ssub.s32 %s10, 1
    %s16 = ssub.s32 %s10, 2
    %s23 = sadd.s32 1, %s18
    %p24 = scmp.ge.s32.totalorder %s23, 5
    %s25 = scalar_select %p24, 0, %s23
    %s26 = sadd.s32 1, %s17
    %s27 = scalar_select %p24, %s26, %s17
    %p28 = scmp.ge.s32.totalorder %s27, 1
    %s29 = scalar_select %p28, 0, %s27
    %s30 = ssub.s32 %s17, %s29
    %s31 = ssub.s32 %s18, %s25
    %s32 = sor.u32 %s30, %s31
    %p33 = scmp.eq.s32.totalorder %s32, 0
    %s35 = sadd.s32 %s34, 1
    %s36 = scalar_select %p33, %s34, %s35
    %p39 = pneg %p33
    %p40 = scmp.eq.s32.totalorder %s10, 4
    %p41 = por %p39, %p40
    %p42 = scmp.ne.s32.totalorder %s34, %s37
    %p43 = scmp.eq.s32.totalorder %s10, 0
    %p44 = por %p42, %p43
    %p45 = scmp.ne.s32.totalorder %s34, %s37
    %p46 = scmp.eq.s32.totalorder %s15, 4
    %p47 = por %p45, %p46
    %p48 = scmp.ne.s32.totalorder %s37, %s38
    %p49 = scmp.eq.s32.totalorder %s15, 0
    %p50 = por %p48, %p49
    %p51 = scmp.ne.s32.totalorder %s37, %s38
    %p52 = scmp.eq.s32.totalorder %s16, 4
    %p53 = por %p51, %p52
    %p55 = scmp.ne.s32.totalorder %s38, %s54
    %p56 = scmp.eq.s32.totalorder %s16, 0
    %p57 = por %p55, %p56
    %s58 = ssub.s32 %s17, %s29
    %s59 = ssub.s32 %s18, %s25
    %s60 = sor.u32 %s58, %s59
    %p61 = scmp.eq.s32.totalorder %s60, 0
    %s63 = sadd.s32 %s62, 1
    %s64 = scalar_select %p61, %s62, %s63
    %p67 = pneg %p61
    %p68 = scmp.eq.s32.totalorder %s10, 4
    %p69 = por %p67, %p68
    %p70 = scmp.ne.s32.totalorder %s62, %s65
    %p71 = scmp.eq.s32.totalorder %s10, 0
    %p72 = por %p70, %p71
    %p73 = scmp.ne.s32.totalorder %s62, %s65
    %p74 = scmp.eq.s32.totalorder %s15, 4
    %p75 = por %p73, %p74
    %p76 = scmp.ne.s32.totalorder %s65, %s66
    %p77 = scmp.eq.s32.totalorder %s15, 0
    %p78 = por %p76, %p77
    %p79 = scmp.ne.s32.totalorder %s65, %s66
    %p80 = scmp.eq.s32.totalorder %s16, 4
    %p81 = por %p79, %p80
    %p83 = scmp.ne.s32.totalorder %s66, %s82
    %p84 = scmp.eq.s32.totalorder %s16, 0
    %p85 = por %p83, %p84
    %s87 = sadd.s32 %s86, 1
    %p90 = scmp.eq.s32.totalorder %s10, 4
    %p91 = scmp.ne.s32.totalorder %s86, %s88
    %p92 = scmp.eq.s32.totalorder %s10, 0
    %p93 = por %p91, %p92
    %p94 = scmp.ne.s32.totalorder %s86, %s88
    %p95 = scmp.eq.s32.totalorder %s15, 4
    %p96 = por %p94, %p95
    %p97 = scmp.ne.s32.totalorder %s88, %s89
    %p98 = scmp.eq.s32.totalorder %s15, 0
    %p99 = por %p97, %p98
    %p100 = scmp.ne.s32.totalorder %s88, %s89
    %p101 = scmp.eq.s32.totalorder %s16, 4
    %p102 = por %p100, %p101
    %p104 = scmp.ne.s32.totalorder %s89, %s103
    %p105 = scmp.eq.s32.totalorder %s16, 0
    %p106 = por %p104, %p105
    %s108 = sadd.s32 %s107, 1
    %p111 = scmp.eq.s32.totalorder %s10, 4
    %p112 = scmp.ne.s32.totalorder %s107, %s109
    %p113 = scmp.eq.s32.totalorder %s10, 0
    %p114 = por %p112, %p113
    %p115 = scmp.ne.s32.totalorder %s107, %s109
    %p116 = scmp.eq.s32.totalorder %s15, 4
    %p117 = por %p115, %p116
    %p118 = scmp.ne.s32.totalorder %s109, %s110
    %p119 = scmp.eq.s32.totalorder %s15, 0
    %p120 = por %p118, %p119
    %p121 = scmp.ne.s32.totalorder %s109, %s110
    %p122 = scmp.eq.s32.totalorder %s16, 4
    %p123 = por %p121, %p122
    %p125 = scmp.ne.s32.totalorder %s110, %s124
    %p126 = scmp.eq.s32.totalorder %s16, 0
    %p127 = por %p125, %p126
    %s128 = ssub.s32 %s17, %s29
    %s129 = ssub.s32 %s18, %s25
    %s130 = sor.u32 %s128, %s129
    %p131 = scmp.eq.s32.totalorder %s130, 0
    %s133 = sadd.s32 %s132, 1
    %s134 = scalar_select %p131, %s132, %s133
    %p137 = pneg %p131
    %p138 = scmp.eq.s32.totalorder %s10, 4
    %p139 = por %p137, %p138
    %p140 = scmp.ne.s32.totalorder %s132, %s135
    %p141 = scmp.eq.s32.totalorder %s10, 0
    %p142 = por %p140, %p141
    %p143 = scmp.ne.s32.totalorder %s132, %s135
    %p144 = scmp.eq.s32.totalorder %s15, 4
    %p145 = por %p143, %p144
    %p146 = scmp.ne.s32.totalorder %s135, %s136
    %p147 = scmp.eq.s32.totalorder %s15, 0
    %p148 = por %p146, %p147
    %p149 = scmp.ne.s32.totalorder %s135, %s136
    %p150 = scmp.eq.s32.totalorder %s16, 4
    %p151 = por %p149, %p150
    %p153 = scmp.ne.s32.totalorder %s136, %s152
    %p154 = scmp.eq.s32.totalorder %s16, 0
    %p155 = por %p153, %p154
    %p156 = scmp.le.s32.totalorder 1, %s10
    %p157 = scmp.lt.s32.totalorder %s10, 6
    %p158 = pnand %p156, %p157
    %p159 = pneg %p158
    // Predicated region
    $region9: #{tpu_custom_call.1} parent=5 // pred_check
      _
    $region10: #{tpu_custom_call.1} parent=5 // pred_check_branch
      %161 = sbr.rel (%p158) target = $region12
    $region11: #{tpu_custom_call.1} parent=5 // pred_region
      %s162 = ssub.s32 %s10, 1
      // Predicated region
      $region13: #{tpu_custom_call.1} parent=11 // pred_check
        %p163 = pneg %p99
      $region14: #{tpu_custom_call.1} parent=11 // pred_check_branch
        %165 = sbr.rel (%p163) target = $region16
      $region15: #{tpu_custom_call.1} parent=11 // pred_region
        _
      $region16: #{tpu_custom_call.1} parent=11 // pred_fallthru
        _
      // Predicated region
      $region17: #{tpu_custom_call.1} parent=11 // pred_check
        %p166 = pneg %p120
      $region18: #{tpu_custom_call.1} parent=11 // pred_check_branch
        %168 = sbr.rel (%p166) target = $region20
      $region19: #{tpu_custom_call.1} parent=11 // pred_region
        _
      $region20: #{tpu_custom_call.1} parent=11 // pred_fallthru
        _
    $region12: #{tpu_custom_call.1} parent=5 // pred_fallthru
      _
    %p169 = scmp.lt.s32.totalorder %s10, 5
    // Predicated region
    $region21: #{tpu_custom_call.1} parent=5 // pred_check
      %p170 = pneg %p169
    $region22: #{tpu_custom_call.1} parent=5 // pred_check_branch
      %172 = sbr.rel (%p170) target = $region24
    $region23: #{tpu_custom_call.1} parent=5 // pred_region
      // Predicated region
      $region25: #{tpu_custom_call.1} parent=23 // pred_check
        %p173 = pneg %p44
      $region26: #{tpu_custom_call.1} parent=23 // pred_check_branch
        %175 = sbr.rel (%p173) target = $region28
      $region27: #{tpu_custom_call.1} parent=23 // pred_region
        %s176 = smul.u32 12, %s18
        %p177 = scmp.lt.s32.totalorder %s17, 0
        %s178 = scalar_select %p177, %s17, 0
        %p179 = scmp.lt.s32.totalorder %s176, 71
        %s180 = scalar_select %p179, %s176, 71
        %s181 = smul.addr %s178, 72
        %s182 = sadd.s32 %s180, %s181
        %s183 = smul.addr %s182, 4
        %s184 = scalar_lea.vmem %s0, %s183
        %s185 = smul.u32 12, %s18
      $region28: #{tpu_custom_call.1} parent=23 // pred_fallthru
        _
      // Predicated region
      $region29: #{tpu_custom_call.1} parent=23 // pred_check
        %p186 = pneg %p72
      $region30: #{tpu_custom_call.1} parent=23 // pred_check_branch
        %188 = sbr.rel (%p186) target = $region32
      $region31: #{tpu_custom_call.1} parent=23 // pred_region
        %p189 = scmp.lt.s32.totalorder %s17, 0
        %s190 = scalar_select %p189, %s17, 0
        %p191 = scmp.lt.s32.totalorder %s18, 4
        %s192 = scalar_select %p191, %s18, 4
        %s193 = smul.addr %s192, 9
        %s194 = smul.addr %s190, 45
        %s195 = sadd.s32 %s193, %s194
        %s196 = smul.addr %s195, 4
        %s197 = scalar_lea.vmem %s1, %s196
      $region32: #{tpu_custom_call.1} parent=23 // pred_fallthru
        _
    $region24: #{tpu_custom_call.1} parent=5 // pred_fallthru
      _
    %p198 = scmp.le.s32.totalorder 1, %s10
    %p199 = scmp.lt.s32.totalorder %s10, 6
    %p200 = pnand %p198, %p199
    %p201 = pneg %p200
    // Predicated region
    $region33: #{tpu_custom_call.1} parent=5 // pred_check
      _
    $region34: #{tpu_custom_call.1} parent=5 // pred_check_branch
      %203 = sbr.rel (%p200) target = $region36
    $region35: #{tpu_custom_call.1} parent=5 // pred_region
      %s204 = ssub.s32 %s10, 1
      %s205 = smul.u32 12, %s20
      %p206 = scmp.lt.s32.totalorder %s19, 0
      %s207 = scalar_select %p206, %s19, 0
      %p208 = scmp.lt.s32.totalorder %s205, 71
      %s209 = scalar_select %p208, %s205, 71
      %s210 = smul.addr %s207, 72
      %s211 = sadd.s32 %s209, %s210
      %s212 = smul.addr %s211, 4
      %s213 = scalar_lea.vmem %s0, %s212
      %p214 = pneg %p50
      %p215 = pneg %p47
      %p216 = scmp.lt.s32.totalorder %s19, 0
      %s217 = scalar_select %p216, %s19, 0
      %p218 = scmp.lt.s32.totalorder %s20, 4
      %s219 = scalar_select %p218, %s20, 4
      %s220 = smul.addr %s219, 9
      %s221 = smul.addr %s217, 45
      %s222 = sadd.s32 %s220, %s221
      %s223 = smul.addr %s222, 4
      %s224 = scalar_lea.vmem %s1, %s223
      %p225 = pneg %p78
      %p226 = pneg %p75
      %p227 = pneg %p99
      %p228 = pneg %p96
      %p229 = pneg %p120
      %p230 = pneg %p117
      %p231 = pneg %p148
      %p232 = pneg %p145
      %s233 = smul.u32 12, %s20
      %p234 = scmp.lt.s32.totalorder %s19, 0
      %s235 = scalar_select %p234, %s19, 0
      %p236 = scmp.lt.s32.totalorder %s233, 59
      %s237 = scalar_select %p236, %s233, 59
      %s238 = smul.addr %s235, 60
      %s239 = sadd.s32 %s237, %s238
      %s240 = smul.addr %s239, 4
      %s241 = scalar_lea.vmem %s4, %s240
      %s242 = smul.u32 12, %s20
      %p243 = scmp.lt.s32.totalorder %s19, 0
      %s244 = scalar_select %p243, %s19, 0
      %p245 = scmp.lt.s32.totalorder %s242, 71
      %s246 = scalar_select %p245, %s242, 71
      %s247 = smul.addr %s244, 72
      %s248 = sadd.s32 %s246, %s247
      %s249 = smul.addr %s248, 4
      %s250 = scalar_lea.vmem %s0, %s249
      %s251 = smul.u32 12, %s20
      %p252 = scmp.lt.s32.totalorder %s19, 0
      %s253 = scalar_select %p252, %s19, 0
      %p254 = scmp.lt.s32.totalorder %s20, 4
      %s255 = scalar_select %p254, %s20, 4
      %s256 = smul.addr %s255, 9
      %s257 = smul.addr %s253, 45
      %s258 = sadd.s32 %s256, %s257
      %s259 = smul.addr %s258, 4
      %s260 = scalar_lea.vmem %s1, %s259
      %s261 = smul.u32 12, %s20
      %p262 = scmp.lt.s32.totalorder %s19, 0
      %s263 = scalar_select %p262, %s19, 0
      %p264 = scmp.lt.s32.totalorder %s261, 59
      %s265 = scalar_select %p264, %s261, 59
      %s266 = smul.addr %s263, 60
      %s267 = sadd.s32 %s265, %s266
      %s268 = smul.addr %s267, 4
      %s269 = scalar_lea.vmem %s4, %s268
      %s270 = smul.u32 12, %s20
      %v272 = vld [vmem:[%s250] sm:$0xf]
      %v273 = vld [vmem:[%s250 + $0x4] sm:$0xf]
      %v274 = vld [vmem:[%s250 + $0x8] sm:$0xf]
      %v275 = vld [vmem:[%s250 + $0xc] sm:$0xf]
      %v276 = vld [vmem:[%s250 + $0x10] sm:$0xf]
      %v277 = vld [vmem:[%s250 + $0x14] sm:$0xf]
      %v278 = vld [vmem:[%s250 + $0x18] sm:$0xf]
      %v279 = vld [vmem:[%s250 + $0x1c] sm:$0xf]
      %v280 = vld [vmem:[%s250 + $0x20] sm:$0xf]
      %v281 = vld [vmem:[%s250 + $0x24] sm:$0xf]
      %v282 = vld [vmem:[%s250 + $0x28] sm:$0xf]
      %v283 = vld [vmem:[%s250 + $0x2c] sm:$0xf]
      %v284 = vld [vmem:[%s260] sm:$0xf]
      %v285 = vld [vmem:[%s260 + $0x4] sm:$0xf]
      %v286 = vld [vmem:[%s260 + $0x8] sm:$0xf]
      %v287 = vld [vmem:[%s260 + $0xc] sm:$0xf]
      %v288 = vld [vmem:[%s260 + $0x10] sm:$0xf]
      %v289 = vld [vmem:[%s260 + $0x14] sm:$0xf]
      %v290 = vld [vmem:[%s260 + $0x18] sm:$0xf]
      %v291 = vld [vmem:[%s2] sm:$0xf]
      %v304 = vunpack.c.l.b16 %v272
      %v305 = vunpack.c.l.b16 %v273
      %v306 = vunpack.c.l.b16 %v274
      %v307 = vunpack.c.l.b16 %v275
      %v308 = vunpack.c.l.b16 %v276
      %v309 = vunpack.c.l.b16 %v277
      %v310 = vunpack.c.l.b16 %v278
      %v311 = vunpack.c.l.b16 %v279
      %v312 = vunpack.c.l.b16 %v280
      %v313 = vunpack.c.l.b16 %v281
      %v314 = vunpack.c.l.b16 %v282
      %v315 = vunpack.c.l.b16 %v283
      %v316 = vpack.c.b16 %v305, %v304
      %v317 = vpack.c.b16 %v307, %v306
      %v318 = vpack.c.b16 %v309, %v308
      %v319 = vpack.c.b16 %v311, %v310
      %v320 = vpack.c.b16 %v313, %v312
      %v321 = vpack.c.b16 %v315, %v314
      %vm322 = vsmask.f32 7424
      %v324 = vshrl.u32 %v316, 16
      %v326 = vshll.u32 %v316, 16
      %v328 = vrot.slane %v326, 1
      %v329 = vor.u32 %v324, %v328
      %v331 = vshll.u32 %v317, 16
      %v333 = vrot.slane %v331, 1
      %v334 = vsel %vm322, %v329, %v333
      %v335 = vshrl.u32 %v317, 16
      %v337 = vor.u32 %v335, %v333
      %v339 = vshll.u32 %v318, 16
      %v341 = vrot.slane %v339, 1
      %v342 = vsel %vm322, %v337, %v341
      %v343 = vshrl.u32 %v318, 16
      %v345 = vor.u32 %v343, %v341
      %v347 = vshll.u32 %v319, 16
      %v349 = vrot.slane %v347, 1
      %v350 = vsel %vm322, %v345, %v349
      %v351 = vshrl.u32 %v319, 16
      %v353 = vor.u32 %v351, %v349
      %v355 = vshll.u32 %v320, 16
      %v357 = vrot.slane %v355, 1
      %v358 = vsel %vm322, %v353, %v357
      %v359 = vshrl.u32 %v320, 16
      %v361 = vor.u32 %v359, %v357
      %v363 = vshll.u32 %v321, 16
      %v365 = vrot.slane %v363, 1
      %v366 = vsel %vm322, %v361, %v365
      %v367 = vshrl.u32 %v321, 16
      %v369 = vor.u32 %v367, %v365
      %v372 = vunpack.c.l.b16 %v284
      %v373 = vpack.c.b16 %v372, %v372
      %v375 = vshll.u32 %v373, 16
      %v377 = vrot.slane %v375, 1
      %vm379 = vcmask 1047552
      %vm380 = vmand %vm379, %vm322
      %v381 = vsel %vm380, %v369, %v377
      %s382 = scalar_lea.vmem %s2, 4
      %v383 = vld [vmem:[%s382] sm:$0xf]
      %vm384 = vcmask 64512
      %v386 = vsel %vm384, %v334, 0
      %v389 = vsel %vm384, %v342, 0
      %v392 = vsel %vm384, %v350, 0
      %v395 = vsel %vm384, %v358, 0
      %v398 = vsel %vm384, %v366, 0
      %v401 = vsel %vm384, %v381, 0
      %vm403 = vcmask 1043456
      %v405 = vsel %vm403, %v383, 0
      %407 = vmatpush.bf16.msra.mxu0 0
      %408 = vmatpush.bf16.msra.mxu0 0
      %409 = vmatpush.bf16.msra.mxu0 0
      %410 = vmatpush.bf16.msra.mxu0 0
      %411 = vmatpush.bf16.msra.mxu0 0
      %412 = vmatpush.bf16.msra.mxu0 0
      %413 = vmatpush.bf16.msra.mxu0 0
      %414 = vmatpush.bf16.msra.mxu0 %v405
      %415 = vmatmul.bf16.gmra.mxu0 %v386
      %v416 = vpop.f32.mrf.mxu0
      %v417 = vadd.f32 0.0, %v416
      %v418 = vpop.f32.mrf.mxu0
      %v419 = vadd.f32 0.0, %v418
      %420 = vmatmul.bf16.gmra.mxu0 %v389
      %v421 = vpop.f32.mrf.mxu0
      %v422 = vadd.f32 0.0, %v421
      %v423 = vpop.f32.mrf.mxu0
      %v424 = vadd.f32 0.0, %v423
      %425 = vmatmul.bf16.gmra.mxu0 %v392
      %v426 = vpop.f32.mrf.mxu0
      %v427 = vadd.f32 0.0, %v426
      %v428 = vpop.f32.mrf.mxu0
      %v429 = vadd.f32 0.0, %v428
      %430 = vmatmul.bf16.gmra.mxu0 %v395
      %v431 = vpop.f32.mrf.mxu0
      %v432 = vadd.f32 0.0, %v431
      %v433 = vpop.f32.mrf.mxu0
      %v434 = vadd.f32 0.0, %v433
      %435 = vmatmul.bf16.gmra.mxu0 %v398
      %v436 = vpop.f32.mrf.mxu0
      %v437 = vadd.f32 0.0, %v436
      %v438 = vpop.f32.mrf.mxu0
      %v439 = vadd.f32 0.0, %v438
      %440 = vmatmul.bf16.gmra.mxu0 %v401
      %v441 = vpop.f32.mrf.mxu0
      %v442 = vadd.f32 0.0, %v441
      %v443 = vpop.f32.mrf.mxu0
      %v444 = vadd.f32 0.0, %v443
      %445 = vdwg.mxu0
      %v446 = vsel %vm384, %v316, 0
      %v448 = vsel %vm384, %v317, 0
      %v450 = vsel %vm384, %v318, 0
      %v452 = vsel %vm384, %v319, 0
      %v454 = vsel %vm384, %v320, 0
      %v456 = vsel %vm384, %v321, 0
      %v459 = vsel %vm403, %v291, 0
      %461 = vmatpush.bf16.msra.mxu0 0
      %462 = vmatpush.bf16.msra.mxu0 0
      %463 = vmatpush.bf16.msra.mxu0 0
      %464 = vmatpush.bf16.msra.mxu0 0
      %465 = vmatpush.bf16.msra.mxu0 0
      %466 = vmatpush.bf16.msra.mxu0 0
      %467 = vmatpush.bf16.msra.mxu0 0
      %468 = vmatpush.bf16.msra.mxu0 %v459
      %469 = vmatmul.bf16.gmra.mxu0 %v446
      %v470 = vpop.f32.mrf.mxu0
      %v471 = vadd.f32 %v417, %v470
      %v472 = vpop.f32.mrf.mxu0
      %v473 = vadd.f32 %v419, %v472
      %474 = vmatmul.bf16.gmra.mxu0 %v448
      %v475 = vpop.f32.mrf.mxu0
      %v476 = vadd.f32 %v422, %v475
      %v477 = vpop.f32.mrf.mxu0
      %v478 = vadd.f32 %v424, %v477
      %479 = vmatmul.bf16.gmra.mxu0 %v450
      %v480 = vpop.f32.mrf.mxu0
      %v481 = vadd.f32 %v427, %v480
      %v482 = vpop.f32.mrf.mxu0
      %v483 = vadd.f32 %v429, %v482
      %484 = vmatmul.bf16.gmra.mxu0 %v452
      %v485 = vpop.f32.mrf.mxu0
      %v486 = vadd.f32 %v432, %v485
      %v487 = vpop.f32.mrf.mxu0
      %v488 = vadd.f32 %v434, %v487
      %489 = vmatmul.bf16.gmra.mxu0 %v454
      %v490 = vpop.f32.mrf.mxu0
      %v491 = vadd.f32 %v437, %v490
      %v492 = vpop.f32.mrf.mxu0
      %v493 = vadd.f32 %v439, %v492
      %494 = vmatmul.bf16.gmra.mxu0 %v456
      %v495 = vpop.f32.mrf.mxu0
      %v496 = vadd.f32 %v442, %v495
      %v497 = vpop.f32.mrf.mxu0
      %v498 = vadd.f32 %v444, %v497
      %499 = vdwg.mxu0
      %vm500 = vcmask 1046528
      %v501 = vrot.slane %v316, 1
      %v502 = vrot.slane %v317, 1
      %v503 = vsel %vm500, %v501, %v502
      %v504 = vrot.slane %v318, 1
      %v505 = vsel %vm500, %v502, %v504
      %v506 = vrot.slane %v319, 1
      %v507 = vsel %vm500, %v504, %v506
      %v508 = vrot.slane %v320, 1
      %v509 = vsel %vm500, %v506, %v508
      %v510 = vrot.slane %v321, 1
      %v511 = vsel %vm500, %v508, %v510
      %v512 = vrot.slane %v373, 1
      %vm513 = vcmask 1046528
      %v516 = vsel %vm513, %v510, %v512
      %s517 = scalar_lea.vmem %s2, 8
      %v518 = vld [vmem:[%s517] sm:$0xf]
      %v520 = vsel %vm384, %v503, 0
      %v523 = vsel %vm384, %v505, 0
      %v526 = vsel %vm384, %v507, 0
      %v529 = vsel %vm384, %v509, 0
      %v532 = vsel %vm384, %v511, 0
      %v534 = vsel %vm384, %v516, 0
      %v537 = vsel %vm403, %v518, 0
      %539 = vmatpush.bf16.msra.mxu0 0
      %540 = vmatpush.bf16.msra.mxu0 0
      %541 = vmatpush.bf16.msra.mxu0 0
      %542 = vmatpush.bf16.msra.mxu0 0
      %543 = vmatpush.bf16.msra.mxu0 0
      %544 = vmatpush.bf16.msra.mxu0 0
      %545 = vmatpush.bf16.msra.mxu0 0
      %546 = vmatpush.bf16.msra.mxu0 %v537
      %547 = vmatmul.bf16.gmra.mxu0 %v520
      %v548 = vpop.f32.mrf.mxu0
      %v549 = vadd.f32 0.0, %v548
      %v550 = vpop.f32.mrf.mxu0
      %v551 = vadd.f32 0.0, %v550
      %552 = vmatmul.bf16.gmra.mxu0 %v523
      %v553 = vpop.f32.mrf.mxu0
      %v554 = vadd.f32 0.0, %v553
      %v555 = vpop.f32.mrf.mxu0
      %v556 = vadd.f32 0.0, %v555
      %557 = vmatmul.bf16.gmra.mxu0 %v526
      %v558 = vpop.f32.mrf.mxu0
      %v559 = vadd.f32 0.0, %v558
      %v560 = vpop.f32.mrf.mxu0
      %v561 = vadd.f32 0.0, %v560
      %562 = vmatmul.bf16.gmra.mxu0 %v529
      %v563 = vpop.f32.mrf.mxu0
      %v564 = vadd.f32 0.0, %v563
      %v565 = vpop.f32.mrf.mxu0
      %v566 = vadd.f32 0.0, %v565
      %567 = vmatmul.bf16.gmra.mxu0 %v532
      %v568 = vpop.f32.mrf.mxu0
      %v569 = vadd.f32 0.0, %v568
      %v570 = vpop.f32.mrf.mxu0
      %v571 = vadd.f32 0.0, %v570
      %572 = vmatmul.bf16.gmra.mxu0 %v534
      %v573 = vpop.f32.mrf.mxu0
      %v574 = vadd.f32 0.0, %v573
      %v575 = vpop.f32.mrf.mxu0
      %v576 = vadd.f32 0.0, %v575
      %577 = vdwg.mxu0
      %v578 = vadd.f32 %v471, %v549
      %v579 = vadd.f32 %v473, %v551
      %v580 = vadd.f32 %v476, %v554
      %v581 = vadd.f32 %v478, %v556
      %v582 = vadd.f32 %v481, %v559
      %v583 = vadd.f32 %v483, %v561
      %v584 = vadd.f32 %v486, %v564
      %v585 = vadd.f32 %v488, %v566
      %v586 = vadd.f32 %v491, %v569
      %v587 = vadd.f32 %v493, %v571
      %v588 = vadd.f32 %v496, %v574
      %v589 = vadd.f32 %v498, %v576
      %v590 = vpack.c.b16 %v308, %v307
      %v591 = vpack.c.b16 %v310, %v309
      %v592 = vpack.c.b16 %v312, %v311
      %v593 = vpack.c.b16 %v314, %v313
      %v594 = vpack.c.b16 %v315, %v315
      %v597 = vunpack.c.l.b16 %v285
      %v598 = vunpack.c.l.b16 %v286
      %v599 = vpack.c.b16 %v598, %v597
      %v601 = vsel %vm403, %v594, %v373
      %s602 = scalar_lea.vmem %s2, 12
      %v603 = vld [vmem:[%s602] sm:$0xf]
      %v605 = vsel %vm384, %v590, 0
      %v608 = vsel %vm384, %v591, 0
      %v611 = vsel %vm384, %v592, 0
      %v614 = vsel %vm384, %v593, 0
      %v616 = vsel %vm384, %v601, 0
      %v619 = vsel %vm384, %v599, 0
      %v622 = vsel %vm403, %v603, 0
      %624 = vmatpush.bf16.msra.mxu0 0
      %625 = vmatpush.bf16.msra.mxu0 0
      %626 = vmatpush.bf16.msra.mxu0 0
      %627 = vmatpush.bf16.msra.mxu0 0
      %628 = vmatpush.bf16.msra.mxu0 0
      %629 = vmatpush.bf16.msra.mxu0 0
      %630 = vmatpush.bf16.msra.mxu0 0
      %631 = vmatpush.bf16.msra.mxu0 %v622
      %632 = vmatmul.bf16.gmra.mxu0 %v605
      %v633 = vpop.f32.mrf.mxu0
      %v634 = vadd.f32 0.0, %v633
      %v635 = vpop.f32.mrf.mxu0
      %v636 = vadd.f32 0.0, %v635
      %637 = vmatmul.bf16.gmra.mxu0 %v608
      %v638 = vpop.f32.mrf.mxu0
      %v639 = vadd.f32 0.0, %v638
      %v640 = vpop.f32.mrf.mxu0
      %v641 = vadd.f32 0.0, %v640
      %642 = vmatmul.bf16.gmra.mxu0 %v611
      %v643 = vpop.f32.mrf.mxu0
      %v644 = vadd.f32 0.0, %v643
      %v645 = vpop.f32.mrf.mxu0
      %v646 = vadd.f32 0.0, %v645
      %647 = vmatmul.bf16.gmra.mxu0 %v614
      %v648 = vpop.f32.mrf.mxu0
      %v649 = vadd.f32 0.0, %v648
      %v650 = vpop.f32.mrf.mxu0
      %v651 = vadd.f32 0.0, %v650
      %652 = vmatmul.bf16.gmra.mxu0 %v616
      %v653 = vpop.f32.mrf.mxu0
      %v654 = vadd.f32 0.0, %v653
      %v655 = vpop.f32.mrf.mxu0
      %v656 = vadd.f32 0.0, %v655
      %657 = vmatmul.bf16.gmra.mxu0 %v619
      %v658 = vpop.f32.mrf.mxu0
      %v659 = vadd.f32 0.0, %v658
      %v660 = vpop.f32.mrf.mxu0
      %v661 = vadd.f32 0.0, %v660
      %662 = vdwg.mxu0
      %v663 = vadd.f32 %v578, %v634
      %v664 = vadd.f32 %v579, %v636
      %v665 = vadd.f32 %v580, %v639
      %v666 = vadd.f32 %v581, %v641
      %v667 = vadd.f32 %v582, %v644
      %v668 = vadd.f32 %v583, %v646
      %v669 = vadd.f32 %v584, %v649
      %v670 = vadd.f32 %v585, %v651
      %v671 = vadd.f32 %v586, %v654
      %v672 = vadd.f32 %v587, %v656
      %v673 = vadd.f32 %v588, %v659
      %v674 = vadd.f32 %v589, %v661
      %v675 = vshrl.u32 %v590, 16
      %v677 = vshll.u32 %v590, 16
      %v679 = vrot.slane %v677, 1
      %v680 = vor.u32 %v675, %v679
      %v681 = vshll.u32 %v591, 16
      %v683 = vrot.slane %v681, 1
      %v684 = vsel %vm322, %v680, %v683
      %v685 = vshrl.u32 %v591, 16
      %v687 = vor.u32 %v685, %v683
      %v688 = vshll.u32 %v592, 16
      %v690 = vrot.slane %v688, 1
      %v691 = vsel %vm322, %v687, %v690
      %v692 = vshrl.u32 %v592, 16
      %v694 = vor.u32 %v692, %v690
      %v695 = vshll.u32 %v593, 16
      %v697 = vrot.slane %v695, 1
      %v698 = vsel %vm322, %v694, %v697
      %v699 = vshrl.u32 %v593, 16
      %v701 = vor.u32 %v699, %v697
      %v702 = vshll.u32 %v594, 16
      %v704 = vrot.slane %v702, 1
      %v705 = vsel %vm322, %v701, %v704
      %v706 = vshrl.u32 %v594, 16
      %v708 = vor.u32 %v706, %v704
      %v711 = vunpack.c.l.b16 %v287
      %v712 = vpack.c.b16 %v597, %v372
      %v713 = vpack.c.b16 %v711, %v598
      %vm714 = vsmask.f32 3328
      %v716 = vshrl.u32 %v712, 16
      %v718 = vrot.slane %v716, 4
      %v719 = vshll.u32 %v712, 16
      %v721 = vrot.slane %v719, 5
      %v722 = vor.u32 %v718, %v721
      %v724 = vshrl.u32 %v713, 16
      %v726 = vrot.slane %v724, 4
      %v727 = vshll.u32 %v713, 16
      %v729 = vrot.slane %v727, 5
      %v730 = vor.u32 %v726, %v729
      %v731 = vsel %vm714, %v722, %v730
      %vm733 = vcmask 1043456
      %vm734 = vmand %vm733, %vm714
      %v735 = vsel %vm734, %v708, %v722
      %s736 = scalar_lea.vmem %s2, 16
      %v737 = vld [vmem:[%s736] sm:$0xf]
      %v739 = vsel %vm384, %v684, 0
      %v742 = vsel %vm384, %v691, 0
      %v745 = vsel %vm384, %v698, 0
      %v748 = vsel %vm384, %v705, 0
      %v751 = vsel %vm384, %v735, 0
      %v754 = vsel %vm384, %v731, 0
      %v757 = vsel %vm403, %v737, 0
      %759 = vmatpush.bf16.msra.mxu0 0
      %760 = vmatpush.bf16.msra.mxu0 0
      %761 = vmatpush.bf16.msra.mxu0 0
      %762 = vmatpush.bf16.msra.mxu0 0
      %763 = vmatpush.bf16.msra.mxu0 0
      %764 = vmatpush.bf16.msra.mxu0 0
      %765 = vmatpush.bf16.msra.mxu0 0
      %766 = vmatpush.bf16.msra.mxu0 %v757
      %767 = vmatmul.bf16.gmra.mxu0 %v739
      %v768 = vpop.f32.mrf.mxu0
      %v769 = vadd.f32 0.0, %v768
      %v770 = vpop.f32.mrf.mxu0
      %v771 = vadd.f32 0.0, %v770
      %772 = vmatmul.bf16.gmra.mxu0 %v742
      %v773 = vpop.f32.mrf.mxu0
      %v774 = vadd.f32 0.0, %v773
      %v775 = vpop.f32.mrf.mxu0
      %v776 = vadd.f32 0.0, %v775
      %777 = vmatmul.bf16.gmra.mxu0 %v745
      %v778 = vpop.f32.mrf.mxu0
      %v779 = vadd.f32 0.0, %v778
      %v780 = vpop.f32.mrf.mxu0
      %v781 = vadd.f32 0.0, %v780
      %782 = vmatmul.bf16.gmra.mxu0 %v748
      %v783 = vpop.f32.mrf.mxu0
      %v784 = vadd.f32 0.0, %v783
      %v785 = vpop.f32.mrf.mxu0
      %v786 = vadd.f32 0.0, %v785
      %787 = vmatmul.bf16.gmra.mxu0 %v751
      %v788 = vpop.f32.mrf.mxu0
      %v789 = vadd.f32 0.0, %v788
      %v790 = vpop.f32.mrf.mxu0
      %v791 = vadd.f32 0.0, %v790
      %792 = vmatmul.bf16.gmra.mxu0 %v754
      %v793 = vpop.f32.mrf.mxu0
      %v794 = vadd.f32 0.0, %v793
      %v795 = vpop.f32.mrf.mxu0
      %v796 = vadd.f32 0.0, %v795
      %797 = vdwg.mxu0
      %v798 = vadd.f32 %v663, %v769
      %v799 = vadd.f32 %v664, %v771
      %v800 = vadd.f32 %v665, %v774
      %v801 = vadd.f32 %v666, %v776
      %v802 = vadd.f32 %v667, %v779
      %v803 = vadd.f32 %v668, %v781
      %v804 = vadd.f32 %v669, %v784
      %v805 = vadd.f32 %v670, %v786
      %v806 = vadd.f32 %v671, %v789
      %v807 = vadd.f32 %v672, %v791
      %v808 = vadd.f32 %v673, %v794
      %v809 = vadd.f32 %v674, %v796
      %v810 = vrot.slane %v590, 1
      %v811 = vrot.slane %v591, 1
      %v812 = vsel %vm500, %v810, %v811
      %v813 = vrot.slane %v592, 1
      %v814 = vsel %vm500, %v811, %v813
      %v815 = vrot.slane %v593, 1
      %v816 = vsel %vm500, %v813, %v815
      %v817 = vrot.slane %v594, 1
      %v818 = vsel %vm500, %v815, %v817
      %vm819 = vcmask 1042432
      %v820 = vrot.slane %v712, 5
      %v821 = vrot.slane %v713, 5
      %v822 = vsel %vm819, %v820, %v821
      %vm823 = vcmask 1042432
      %v826 = vsel %vm823, %v817, %v820
      %s827 = scalar_lea.vmem %s2, 20
      %v828 = vld [vmem:[%s827] sm:$0xf]
      %v830 = vsel %vm384, %v812, 0
      %v833 = vsel %vm384, %v814, 0
      %v836 = vsel %vm384, %v816, 0
      %v839 = vsel %vm384, %v818, 0
      %v841 = vsel %vm384, %v826, 0
      %v844 = vsel %vm384, %v822, 0
      %v847 = vsel %vm403, %v828, 0
      %849 = vmatpush.bf16.msra.mxu0 0
      %850 = vmatpush.bf16.msra.mxu0 0
      %851 = vmatpush.bf16.msra.mxu0 0
      %852 = vmatpush.bf16.msra.mxu0 0
      %853 = vmatpush.bf16.msra.mxu0 0
      %854 = vmatpush.bf16.msra.mxu0 0
      %855 = vmatpush.bf16.msra.mxu0 0
      %856 = vmatpush.bf16.msra.mxu0 %v847
      %857 = vmatmul.bf16.gmra.mxu0 %v830
      %v858 = vpop.f32.mrf.mxu0
      %v859 = vadd.f32 0.0, %v858
      %v860 = vpop.f32.mrf.mxu0
      %v861 = vadd.f32 0.0, %v860
      %862 = vmatmul.bf16.gmra.mxu0 %v833
      %v863 = vpop.f32.mrf.mxu0
      %v864 = vadd.f32 0.0, %v863
      %v865 = vpop.f32.mrf.mxu0
      %v866 = vadd.f32 0.0, %v865
      %867 = vmatmul.bf16.gmra.mxu0 %v836
      %v868 = vpop.f32.mrf.mxu0
      %v869 = vadd.f32 0.0, %v868
      %v870 = vpop.f32.mrf.mxu0
      %v871 = vadd.f32 0.0, %v870
      %872 = vmatmul.bf16.gmra.mxu0 %v839
      %v873 = vpop.f32.mrf.mxu0
      %v874 = vadd.f32 0.0, %v873
      %v875 = vpop.f32.mrf.mxu0
      %v876 = vadd.f32 0.0, %v875
      %877 = vmatmul.bf16.gmra.mxu0 %v841
      %v878 = vpop.f32.mrf.mxu0
      %v879 = vadd.f32 0.0, %v878
      %v880 = vpop.f32.mrf.mxu0
      %v881 = vadd.f32 0.0, %v880
      %882 = vmatmul.bf16.gmra.mxu0 %v844
      %v883 = vpop.f32.mrf.mxu0
      %v884 = vadd.f32 0.0, %v883
      %v885 = vpop.f32.mrf.mxu0
      %v886 = vadd.f32 0.0, %v885
      %887 = vdwg.mxu0
      %v888 = vadd.f32 %v798, %v859
      %v889 = vadd.f32 %v799, %v861
      %v890 = vadd.f32 %v800, %v864
      %v891 = vadd.f32 %v801, %v866
      %v892 = vadd.f32 %v802, %v869
      %v893 = vadd.f32 %v803, %v871
      %v894 = vadd.f32 %v804, %v874
      %v895 = vadd.f32 %v805, %v876
      %v896 = vadd.f32 %v806, %v879
      %v897 = vadd.f32 %v807, %v881
      %v898 = vadd.f32 %v808, %v884
      %v899 = vadd.f32 %v809, %v886
      %v902 = vunpack.c.l.b16 %v288
      %v903 = vunpack.c.l.b16 %v289
      %v904 = vpack.c.b16 %v903, %v902
      %s905 = scalar_lea.vmem %s2, 24
      %v906 = vld [vmem:[%s905] sm:$0xf]
      %v907 = vsel %vm384, %v712, 0
      %v909 = vsel %vm384, %v713, 0
      %v912 = vsel %vm384, %v904, 0
      %v915 = vsel %vm403, %v906, 0
      %917 = vmatpush.bf16.msra.mxu0 0
      %918 = vmatpush.bf16.msra.mxu0 0
      %919 = vmatpush.bf16.msra.mxu0 0
      %920 = vmatpush.bf16.msra.mxu0 0
      %921 = vmatpush.bf16.msra.mxu0 0
      %922 = vmatpush.bf16.msra.mxu0 0
      %923 = vmatpush.bf16.msra.mxu0 0
      %924 = vmatpush.bf16.msra.mxu0 %v915
      %925 = vmatmul.bf16.gmra.mxu0 %v452
      %v926 = vpop.f32.mrf.mxu0
      %v927 = vadd.f32 0.0, %v926
      %v928 = vpop.f32.mrf.mxu0
      %v929 = vadd.f32 0.0, %v928
      %930 = vmatmul.bf16.gmra.mxu0 %v454
      %v931 = vpop.f32.mrf.mxu0
      %v932 = vadd.f32 0.0, %v931
      %v933 = vpop.f32.mrf.mxu0
      %v934 = vadd.f32 0.0, %v933
      %935 = vmatmul.bf16.gmra.mxu0 %v456
      %v936 = vpop.f32.mrf.mxu0
      %v937 = vadd.f32 0.0, %v936
      %v938 = vpop.f32.mrf.mxu0
      %v939 = vadd.f32 0.0, %v938
      %940 = vmatmul.bf16.gmra.mxu0 %v907
      %v941 = vpop.f32.mrf.mxu0
      %v942 = vadd.f32 0.0, %v941
      %v943 = vpop.f32.mrf.mxu0
      %v944 = vadd.f32 0.0, %v943
      %945 = vmatmul.bf16.gmra.mxu0 %v909
      %v946 = vpop.f32.mrf.mxu0
      %v947 = vadd.f32 0.0, %v946
      %v948 = vpop.f32.mrf.mxu0
      %v949 = vadd.f32 0.0, %v948
      %950 = vmatmul.bf16.gmra.mxu0 %v912
      %v951 = vpop.f32.mrf.mxu0
      %v952 = vadd.f32 0.0, %v951
      %v953 = vpop.f32.mrf.mxu0
      %v954 = vadd.f32 0.0, %v953
      %955 = vdwg.mxu0
      %v956 = vadd.f32 %v888, %v927
      %v957 = vadd.f32 %v889, %v929
      %v958 = vadd.f32 %v890, %v932
      %v959 = vadd.f32 %v891, %v934
      %v960 = vadd.f32 %v892, %v937
      %v961 = vadd.f32 %v893, %v939
      %v962 = vadd.f32 %v894, %v942
      %v963 = vadd.f32 %v895, %v944
      %v964 = vadd.f32 %v896, %v947
      %v965 = vadd.f32 %v897, %v949
      %v966 = vadd.f32 %v898, %v952
      %v967 = vadd.f32 %v899, %v954
      %v969 = vunpack.c.l.b16 %v290
      %v970 = vpack.c.b16 %v969, %v969
      %v971 = vrot.slane %v719, 1
      %v972 = vor.u32 %v716, %v971
      %v973 = vrot.slane %v727, 1
      %v974 = vsel %vm322, %v972, %v973
      %v975 = vor.u32 %v724, %v973
      %v976 = vshll.u32 %v904, 16
      %v978 = vrot.slane %v976, 1
      %v979 = vsel %vm322, %v975, %v978
      %v980 = vshrl.u32 %v904, 16
      %v982 = vor.u32 %v980, %v978
      %v984 = vshll.u32 %v970, 16
      %v986 = vrot.slane %v984, 1
      %v987 = vsel %vm322, %v982, %v986
      %v989 = vsel %vm380, %v369, %v971
      %s990 = scalar_lea.vmem %s2, 28
      %v991 = vld [vmem:[%s990] sm:$0xf]
      %v993 = vsel %vm384, %v989, 0
      %v996 = vsel %vm384, %v974, 0
      %v999 = vsel %vm384, %v979, 0
      %v1002 = vsel %vm384, %v987, 0
      %v1005 = vsel %vm403, %v991, 0
      %1007 = vmatpush.bf16.msra.mxu0 0
      %1008 = vmatpush.bf16.msra.mxu0 0
      %1009 = vmatpush.bf16.msra.mxu0 0
      %1010 = vmatpush.bf16.msra.mxu0 0
      %1011 = vmatpush.bf16.msra.mxu0 0
      %1012 = vmatpush.bf16.msra.mxu0 0
      %1013 = vmatpush.bf16.msra.mxu0 0
      %1014 = vmatpush.bf16.msra.mxu0 %v1005
      %1015 = vmatmul.bf16.gmra.mxu0 %v395
      %v1016 = vpop.f32.mrf.mxu0
      %v1017 = vadd.f32 0.0, %v1016
      %v1018 = vpop.f32.mrf.mxu0
      %v1019 = vadd.f32 0.0, %v1018
      %1020 = vmatmul.bf16.gmra.mxu0 %v398
      %v1021 = vpop.f32.mrf.mxu0
      %v1022 = vadd.f32 0.0, %v1021
      %v1023 = vpop.f32.mrf.mxu0
      %v1024 = vadd.f32 0.0, %v1023
      %1025 = vmatmul.bf16.gmra.mxu0 %v993
      %v1026 = vpop.f32.mrf.mxu0
      %v1027 = vadd.f32 0.0, %v1026
      %v1028 = vpop.f32.mrf.mxu0
      %v1029 = vadd.f32 0.0, %v1028
      %1030 = vmatmul.bf16.gmra.mxu0 %v996
      %v1031 = vpop.f32.mrf.mxu0
      %v1032 = vadd.f32 0.0, %v1031
      %v1033 = vpop.f32.mrf.mxu0
      %v1034 = vadd.f32 0.0, %v1033
      %1035 = vmatmul.bf16.gmra.mxu0 %v999
      %v1036 = vpop.f32.mrf.mxu0
      %v1037 = vadd.f32 0.0, %v1036
      %v1038 = vpop.f32.mrf.mxu0
      %v1039 = vadd.f32 0.0, %v1038
      %1040 = vmatmul.bf16.gmra.mxu0 %v1002
      %v1041 = vpop.f32.mrf.mxu0
      %v1042 = vadd.f32 0.0, %v1041
      %v1043 = vpop.f32.mrf.mxu0
      %v1044 = vadd.f32 0.0, %v1043
      %1045 = vdwg.mxu0
      %v1046 = vadd.f32 %v956, %v1017
      %v1047 = vadd.f32 %v957, %v1019
      %v1048 = vadd.f32 %v958, %v1022
      %v1049 = vadd.f32 %v959, %v1024
      %v1050 = vadd.f32 %v960, %v1027
      %v1051 = vadd.f32 %v961, %v1029
      %v1052 = vadd.f32 %v962, %v1032
      %v1053 = vadd.f32 %v963, %v1034
      %v1054 = vadd.f32 %v964, %v1037
      %v1055 = vadd.f32 %v965, %v1039
      %v1056 = vadd.f32 %v966, %v1042
      %v1057 = vadd.f32 %v967, %v1044
      %v1058 = vrot.slane %v712, 1
      %v1059 = vrot.slane %v713, 1
      %v1060 = vsel %vm500, %v1058, %v1059
      %v1061 = vrot.slane %v904, 1
      %v1062 = vsel %vm500, %v1059, %v1061
      %v1063 = vrot.slane %v970, 1
      %v1064 = vsel %vm500, %v1061, %v1063
      %v1066 = vsel %vm513, %v510, %v1058
      %s1067 = scalar_lea.vmem %s2, 32
      %v1068 = vld [vmem:[%s1067] sm:$0xf]
      %v1069 = vsel %vm384, %v1066, 0
      %v1072 = vsel %vm384, %v1060, 0
      %v1075 = vsel %vm384, %v1062, 0
      %v1078 = vsel %vm384, %v1064, 0
      %v1081 = vsel %vm403, %v1068, 0
      %1083 = vmatpush.bf16.msra.mxu0 0
      %1084 = vmatpush.bf16.msra.mxu0 0
      %1085 = vmatpush.bf16.msra.mxu0 0
      %1086 = vmatpush.bf16.msra.mxu0 0
      %1087 = vmatpush.bf16.msra.mxu0 0
      %1088 = vmatpush.bf16.msra.mxu0 0
      %1089 = vmatpush.bf16.msra.mxu0 0
      %1090 = vmatpush.bf16.msra.mxu0 %v1081
      %1091 = vmatmul.bf16.gmra.mxu0 %v529
      %v1092 = vpop.f32.mrf.mxu0
      %v1093 = vadd.f32 0.0, %v1092
      %v1094 = vpop.f32.mrf.mxu0
      %v1095 = vadd.f32 0.0, %v1094
      %1096 = vmatmul.bf16.gmra.mxu0 %v532
      %v1097 = vpop.f32.mrf.mxu0
      %v1098 = vadd.f32 0.0, %v1097
      %v1099 = vpop.f32.mrf.mxu0
      %v1100 = vadd.f32 0.0, %v1099
      %1101 = vmatmul.bf16.gmra.mxu0 %v1069
      %v1102 = vpop.f32.mrf.mxu0
      %v1103 = vadd.f32 0.0, %v1102
      %v1104 = vpop.f32.mrf.mxu0
      %v1105 = vadd.f32 0.0, %v1104
      %1106 = vmatmul.bf16.gmra.mxu0 %v1072
      %v1107 = vpop.f32.mrf.mxu0
      %v1108 = vadd.f32 0.0, %v1107
      %v1109 = vpop.f32.mrf.mxu0
      %v1110 = vadd.f32 0.0, %v1109
      %1111 = vmatmul.bf16.gmra.mxu0 %v1075
      %v1112 = vpop.f32.mrf.mxu0
      %v1113 = vadd.f32 0.0, %v1112
      %v1114 = vpop.f32.mrf.mxu0
      %v1115 = vadd.f32 0.0, %v1114
      %1116 = vmatmul.bf16.gmra.mxu0 %v1078
      %v1117 = vpop.f32.mrf.mxu0
      %v1118 = vadd.f32 0.0, %v1117
      %v1119 = vpop.f32.mrf.mxu0
      %v1120 = vadd.f32 0.0, %v1119
      %1121 = vdwg.mxu0
      %v1122 = vadd.f32 %v1046, %v1093
      %v1123 = vadd.f32 %v1047, %v1095
      %v1124 = vadd.f32 %v1048, %v1098
      %v1125 = vadd.f32 %v1049, %v1100
      %v1126 = vadd.f32 %v1050, %v1103
      %v1127 = vadd.f32 %v1051, %v1105
      %v1128 = vadd.f32 %v1052, %v1108
      %v1129 = vadd.f32 %v1053, %v1110
      %v1130 = vadd.f32 %v1054, %v1113
      %v1131 = vadd.f32 %v1055, %v1115
      %v1132 = vadd.f32 %v1056, %v1118
      %v1133 = vadd.f32 %v1057, %v1120
      %v1134 = vld [vmem:[%s3] sm:$0x1]
      %v1136 = vperm.slane %v1134, 0
      %v1138 = vadd.f32 %v1122, %v1136
      %v1139 = vadd.f32 %v1123, %v1136
      %v1140 = vadd.f32 %v1124, %v1136
      %v1141 = vadd.f32 %v1125, %v1136
      %v1142 = vadd.f32 %v1126, %v1136
      %v1143 = vadd.f32 %v1127, %v1136
      %v1144 = vadd.f32 %v1128, %v1136
      %v1145 = vadd.f32 %v1129, %v1136
      %v1146 = vadd.f32 %v1130, %v1136
      %v1147 = vadd.f32 %v1131, %v1136
      %v1148 = vadd.f32 %v1132, %v1136
      %v1149 = vadd.f32 %v1133, %v1136
      %v1150 = vmax.f32 %v1138, 0.0
      %v1151 = vmax.f32 %v1139, 0.0
      %v1152 = vmax.f32 %v1140, 0.0
      %v1153 = vmax.f32 %v1141, 0.0
      %v1154 = vmax.f32 %v1142, 0.0
      %v1155 = vmax.f32 %v1143, 0.0
      %v1156 = vmax.f32 %v1144, 0.0
      %v1157 = vmax.f32 %v1145, 0.0
      %v1158 = vmax.f32 %v1146, 0.0
      %v1159 = vmax.f32 %v1147, 0.0
      %v1160 = vmax.f32 %v1148, 0.0
      %v1161 = vmax.f32 %v1149, 0.0
      %v1162 = vpack.c.bf16 %v1150, %v1150
      %v1163 = vpack.c.bf16 %v1151, %v1151
      %v1164 = vpack.c.bf16 %v1152, %v1152
      %v1165 = vpack.c.bf16 %v1153, %v1153
      %v1166 = vpack.c.bf16 %v1154, %v1154
      %v1167 = vpack.c.bf16 %v1155, %v1155
      %v1168 = vpack.c.bf16 %v1156, %v1156
      %v1169 = vpack.c.bf16 %v1157, %v1157
      %v1170 = vpack.c.bf16 %v1158, %v1158
      %v1171 = vpack.c.bf16 %v1159, %v1159
      %v1172 = vpack.c.bf16 %v1160, %v1160
      %v1173 = vpack.c.bf16 %v1161, %v1161
      %vm1174 = vcmask 125952
      %1175 = vst.msk [vmem:[%s269] sm:$0xf] %vm1174, %v1162
      %1176 = vst.msk [vmem:[%s269 + $0x4] sm:$0xf] %vm1174, %v1163
      %1177 = vst.msk [vmem:[%s269 + $0x8] sm:$0xf] %vm1174, %v1164
      %1178 = vst.msk [vmem:[%s269 + $0xc] sm:$0xf] %vm1174, %v1165
      %1179 = vst.msk [vmem:[%s269 + $0x10] sm:$0xf] %vm1174, %v1166
      %1180 = vst.msk [vmem:[%s269 + $0x14] sm:$0xf] %vm1174, %v1167
      %1181 = vst.msk [vmem:[%s269 + $0x18] sm:$0xf] %vm1174, %v1168
      %1182 = vst.msk [vmem:[%s269 + $0x1c] sm:$0xf] %vm1174, %v1169
      %1183 = vst.msk [vmem:[%s269 + $0x20] sm:$0xf] %vm1174, %v1170
      %1184 = vst.msk [vmem:[%s269 + $0x24] sm:$0xf] %vm1174, %v1171
      %1185 = vst.msk [vmem:[%s269 + $0x28] sm:$0xf] %vm1174, %v1172
      %1186 = vst.msk [vmem:[%s269 + $0x2c] sm:$0xf] %vm1174, %v1173
      %s1187 = smul.u32 12, %s20
      %p1188 = scmp.lt.s32.totalorder %s19, 0
      %s1189 = scalar_select %p1188, %s19, 0
      %p1190 = scmp.lt.s32.totalorder %s1187, 59
      %s1191 = scalar_select %p1190, %s1187, 59
      %s1192 = smul.addr %s1189, 60
      %s1193 = sadd.s32 %s1191, %s1192
      %s1194 = smul.addr %s1193, 4
      %s1195 = scalar_lea.vmem %s4, %s1194
      // Predicated region
      $region37: #{tpu_custom_call.1} parent=35 // pred_check
        %p1196 = pneg %p145
      $region38: #{tpu_custom_call.1} parent=35 // pred_check_branch
        %1198 = sbr.rel (%p1196) target = $region40
      $region39: #{tpu_custom_call.1} parent=35 // pred_region
        %s1199 = smul.u32 12, %s20
      $region40: #{tpu_custom_call.1} parent=35 // pred_fallthru
        _
    $region36: #{tpu_custom_call.1} parent=5 // pred_fallthru
      _
    %p1200 = scmp.le.s32.totalorder 2, %s10
    // Predicated region
    $region41: #{tpu_custom_call.1} parent=5 // pred_check
      %p1201 = pneg %p1200
    $region42: #{tpu_custom_call.1} parent=5 // pred_check_branch
      %1203 = sbr.rel (%p1201) target = $region44
    $region43: #{tpu_custom_call.1} parent=5 // pred_region
      %s1204 = ssub.s32 %s10, 2
      // Predicated region
      $region45: #{tpu_custom_call.1} parent=43 // pred_check
        %p1205 = pneg %p151
      $region46: #{tpu_custom_call.1} parent=43 // pred_check_branch
        %1207 = sbr.rel (%p1205) target = $region48
      $region47: #{tpu_custom_call.1} parent=43 // pred_region
        %s1208 = smul.u32 12, %s22
        %p1209 = scmp.lt.s32.totalorder %s21, 0
        %s1210 = scalar_select %p1209, %s21, 0
        %p1211 = scmp.lt.s32.totalorder %s1208, 59
        %s1212 = scalar_select %p1211, %s1208, 59
        %s1213 = smul.addr %s1210, 60
        %s1214 = sadd.s32 %s1212, %s1213
        %s1215 = smul.addr %s1214, 4
        %s1216 = scalar_lea.vmem %s4, %s1215
      $region48: #{tpu_custom_call.1} parent=43 // pred_fallthru
        _
    $region44: #{tpu_custom_call.1} parent=5 // pred_fallthru
      _
  $region6: #{tpu_custom_call.1} parent=0 // loop_footer
    %s14 = sadd.s32 1, %s10
  $region7: #{tpu_custom_call.1} parent=0 // loop_footer_branch
    %9 = sbr.rel target = $region3
  $region8: #{tpu_custom_call.1} parent=0 // loop_exit
    _

</llo_original>
